<compile_context>
chip_gen: v7x
topology: tpu7x:2x2x1
jax: 0.10.0
libtpu: 0.0.40
codegen_flags: <defaults>
</compile_context>

<pallas_src>
import jax
import jax.numpy as jnp
from jax import lax
from jax.experimental import pallas as pl
from jax.experimental.pallas import tpu as pltpu


def critic_fused_kernel(x_ref, w1_ref, b1_ref, w2_ref, b2_ref, w3_ref, b3_ref,
                        o_ref):
    """One batch tile, whole ensemble in a single fused matmul chain.

    x_ref : (TB, in_dim)      bf16
    w1_ref: (in_dim, NC*H)    bf16   b1_ref: (1, NC*H) f32
    w2_ref: (NC*H, NC*H)      bf16 (block-diagonal)   b2_ref: (1, NC*H) f32
    w3_ref: (NC, NC*H)        bf16 (zero off-blocks)  b3_ref: (NC, 1)  f32
    o_ref : (NC, TB)          f32  (lane-dense, single full-tile store)
    """
    x = x_ref[...]                                                    # bf16
    # Layer 1 (all critics at once).
    h1 = jnp.dot(x, w1_ref[...], preferred_element_type=jnp.float32)  # (TB, NC*H)
    h1 = jnp.maximum(h1 + b1_ref[...], 0.0)
    # Layer 2: block-diagonal weight == independent per-critic Linear(H, H).
    h2 = jnp.dot(h1.astype(jnp.bfloat16), w2_ref[...],
                 preferred_element_type=jnp.float32)                  # (TB, NC*H)
    h2 = jnp.maximum(h2 + b2_ref[...], 0.0)
    # Head: (NC, NC*H) contracted with (TB, NC*H) on the feature axis
    # -> (NC, TB), already lane-oriented (no (TB,1)->(TB,) relayout).
    r = lax.dot_general(w3_ref[...], h2.astype(jnp.bfloat16),
                        dimension_numbers=(((1,), (1,)), ((), ())),
                        preferred_element_type=jnp.float32)           # (NC, TB)
    o_ref[...] = (r + b3_ref[...]).astype(o_ref.dtype)


def _choose_tile(batch, requested):
    """Pick a lane-dense batch tile and the padded batch size.

    Keeps the tile a multiple of 128 (unmasked stores on the (NC, TB) output),
    caps it at `requested`, and prefers >= 2 grid steps so the 'parallel' axis
    can shard across both v7x TensorCores.
    """
    bp = int(pl.cdiv(batch, 128)) * 128
    tb = min(requested, bp)
    tb = max(128, (tb // 128) * 128)
    if bp // tb < 2 and bp >= 256:
        tb = max(128, ((bp // 2) // 128) * 128)
    bp = int(pl.cdiv(bp, tb)) * tb
    return bp, tb


def critic_forward(obs, act, packed_params, *, block_b=1024):
    """obs: (B, obs_dim), act: (B, act_dim) -> values (B, num_critics) f32."""
    w1p, b1p, w2p, b2p, w3p, b3p = packed_params
    B = obs.shape[0]
    in_dim, feat = w1p.shape
    num_critics = w3p.shape[0]

    # Wrapper-side concat + bf16 cast: one K=in_dim dot, half the input DMA bytes.
    x = jnp.concatenate([obs, act], axis=-1).astype(jnp.bfloat16)
    assert x.shape[1] == in_dim

    bp, tb = _choose_tile(B, block_b)
    if bp != B:
        x = jnp.pad(x, ((0, bp - B), (0, 0)))
    nb = bp // tb

    def resident(arr):
        zeros = (0,) * arr.ndim
        return pl.BlockSpec(arr.shape, lambda i, _z=zeros: _z)

    flops = 2 * bp * (in_dim * feat + feat * feat + num_critics * feat)
    param_bytes = sum(int(p.size) * p.dtype.itemsize
                      for p in (w1p, b1p, w2p, b2p, w3p, b3p))
    bytes_accessed = int(x.size) * 2 + bp * num_critics * 4 + param_bytes

    out_t = pl.pallas_call(
        critic_fused_kernel,
        out_shape=jax.ShapeDtypeStruct((num_critics, bp), jnp.float32),
        grid_spec=pltpu.PrefetchScalarGridSpec(
            num_scalar_prefetch=0,
            grid=(nb,),
            in_specs=[
                pl.BlockSpec((tb, in_dim), lambda i: (i, 0)),   # streamed per tile
                resident(w1p), resident(b1p),
                resident(w2p), resident(b2p),
                resident(w3p), resident(b3p),
            ],
            out_specs=pl.BlockSpec((num_critics, tb), lambda i: (0, i)),
        ),
        compiler_params=pltpu.CompilerParams(
            dimension_semantics=("parallel",),   # v7x: shard batch tiles over 2 TCs
        ),
        cost_estimate=pl.CostEstimate(flops=flops, transcendentals=0,
                                      bytes_accessed=bytes_accessed),
    )(x, w1p, b1p, w2p, b2p, w3p, b3p)

    # Slice off the batch padding and transpose back to (B, num_critics).
    return out_t[:, :B].T


def init_params(key, obs_dim, act_dim, hidden, num_critics):
    """Per-critic f32 params mirroring nn.Linear default init."""
    in_dim = obs_dim + act_dim

    def linear(k, fan_in, fan_out):
        kw, kb = jax.random.split(k)
        bound = 1.0 / float(fan_in) ** 0.5
        w = jax.random.uniform(kw, (fan_in, fan_out), jnp.float32, -bound, bound)
        b = jax.random.uniform(kb, (fan_out,), jnp.float32, -bound, bound)
        return w, b

    w1_l, b1_l, w2_l, b2_l, w3_l, b3_l = [], [], [], [], [], []
    for k in jax.random.split(key, num_critics):
        k1, k2, k3 = jax.random.split(k, 3)
        w1, b1 = linear(k1, in_dim, hidden)
        w2, b2 = linear(k2, hidden, hidden)
        w3, b3 = linear(k3, hidden, 1)
        w1_l.append(w1); b1_l.append(b1)
        w2_l.append(w2); b2_l.append(b2)
        w3_l.append(w3[:, 0]); b3_l.append(b3[0])

    s = jnp.stack
    return (s(w1_l), s(b1_l), s(w2_l), s(b2_l), s(w3_l), s(b3_l))


def pack_params(params):
    """Pack the per-critic params into the fused-ensemble layout (bf16 weights)."""
    w1, b1, w2, b2, w3, b3 = params
    nc, in_dim, h = w1.shape
    feat = nc * h

    w1p = jnp.transpose(w1, (1, 0, 2)).reshape(in_dim, feat)     # col block j = critic j
    b1p = b1.reshape(1, feat)

    w2p = jnp.zeros((feat, feat), jnp.float32)                   # block-diagonal
    w3p = jnp.zeros((nc, feat), jnp.float32)                     # zero off-blocks
    for j in range(nc):
        w2p = w2p.at[j * h:(j + 1) * h, j * h:(j + 1) * h].set(w2[j])
        w3p = w3p.at[j, j * h:(j + 1) * h].set(w3[j])
    b2p = b2.reshape(1, feat)
    b3p = b3.reshape(nc, 1)

    return (w1p.astype(jnp.bfloat16), b1p,
            w2p.astype(jnp.bfloat16), b2p,
            w3p.astype(jnp.bfloat16), b3p)


def reference_forward(obs, act, params):
    """Pure-JAX f32 reference of the Critic ensemble forward."""
    w1, b1, w2, b2, w3, b3 = params
    x = jnp.concatenate([obs, act], axis=-1)
    outs = []
    for j in range(w1.shape[0]):
        h1 = jnp.maximum(x @ w1[j] + b1[j], 0.0)
        h2 = jnp.maximum(h1 @ w2[j] + b2[j], 0.0)
        outs.append(h2 @ w3[j] + b3[j])               # (B,)
    return jnp.stack(outs, axis=-1)                   # (B, num_critics)


if __name__ == "__main__":
    key = jax.random.PRNGKey(0)
    k_obs, k_act, k_par = jax.random.split(key, 3)

    B, OBS_DIM, ACT_DIM, HIDDEN, NUM_CRITICS = 256, 24, 8, 128, 2
    obs = jax.random.normal(k_obs, (B, OBS_DIM), jnp.float32)
    act = jax.random.normal(k_act, (B, ACT_DIM), jnp.float32)
    params = init_params(k_par, OBS_DIM, ACT_DIM, HIDDEN, NUM_CRITICS)
    packed = pack_params(params)

    out = jax.block_until_ready(critic_forward(obs, act, packed))
    ref = reference_forward(obs, act, params)

    assert out.shape == (B, NUM_CRITICS), out.shape
    # bf16 weight/activation storage with f32 accumulation -> loose tolerance.
    max_err = float(jnp.max(jnp.abs(out - ref)))
    assert max_err < 2e-2, f"max abs err {max_err}"

    print("KERNEL_OK")
</pallas_src>

<mosaic_0001>
module attributes {stable_mosaic.version = 11 : i64} {
  func.func @critic_fused_kernel(%arg0: i32, %arg1: memref<128x32xbf16, #tpu.memory_space<vmem>>, %arg2: memref<32x256xbf16, #tpu.memory_space<vmem>>, %arg3: memref<1x256xf32, #tpu.memory_space<vmem>>, %arg4: memref<256x256xbf16, #tpu.memory_space<vmem>>, %arg5: memref<1x256xf32, #tpu.memory_space<vmem>>, %arg6: memref<2x256xbf16, #tpu.memory_space<vmem>>, %arg7: memref<2x1xf32, #tpu.memory_space<vmem>>, %arg8: memref<2x128xf32, #tpu.memory_space<vmem>>) attributes {dimension_semantics = [#tpu.dimension_semantics<parallel>], iteration_bounds = array<i64: 2>, scalar_prefetch = 0 : i64, scratch_operands = 0 : i64, tpu.core_type = #tpu.core_type<tc>, window_params = [{transform_indices = @transform_0, window_bounds = array<i64: 128, 32>}, {pipeline_mode = #tpu.pipeline_mode<synchronous>, transform_indices = @transform_1, window_bounds = array<i64: 32, 256>}, {pipeline_mode = #tpu.pipeline_mode<synchronous>, transform_indices = @transform_2, window_bounds = array<i64: 1, 256>}, {pipeline_mode = #tpu.pipeline_mode<synchronous>, transform_indices = @transform_3, window_bounds = array<i64: 256, 256>}, {pipeline_mode = #tpu.pipeline_mode<synchronous>, transform_indices = @transform_4, window_bounds = array<i64: 1, 256>}, {pipeline_mode = #tpu.pipeline_mode<synchronous>, transform_indices = @transform_5, window_bounds = array<i64: 2, 256>}, {pipeline_mode = #tpu.pipeline_mode<synchronous>, transform_indices = @transform_6, window_bounds = array<i64: 2, 1>}, {transform_indices = @transform_7, window_bounds = array<i64: 2, 128>}]} {
    %c0 = arith.constant 0 : index
    %c0_0 = arith.constant 0 : index
    %0 = vector.load %arg1[%c0, %c0_0] : memref<128x32xbf16, #tpu.memory_space<vmem>>, vector<128x32xbf16>
    %c0_1 = arith.constant 0 : index
    %c0_2 = arith.constant 0 : index
    %1 = vector.load %arg2[%c0_1, %c0_2] : memref<32x256xbf16, #tpu.memory_space<vmem>>, vector<32x256xbf16>
    %cst = arith.constant dense<0.000000e+00> : vector<128x256xf32>
    %2 = tpu.matmul %0, %1, %cst {dimension_numbers = #tpu.dot_dimension_numbers<[1], [0], [0], [1], [0, 0, 1, 1], [], []>} : vector<128x32xbf16>, vector<32x256xbf16>, vector<128x256xf32> -> vector<128x256xf32>
    %c0_3 = arith.constant 0 : index
    %c0_4 = arith.constant 0 : index
    %3 = vector.load %arg3[%c0_3, %c0_4] : memref<1x256xf32, #tpu.memory_space<vmem>>, vector<1x256xf32>
    %4 = vector.broadcast %3 : vector<1x256xf32> to vector<128x256xf32>
    %5 = arith.addf %2, %4 : vector<128x256xf32>
    %cst_5 = arith.constant 0.000000e+00 : f32
    %6 = vector.broadcast %cst_5 : f32 to vector<128x256xf32>
    %7 = arith.maximumf %5, %6 : vector<128x256xf32>
    %8 = arith.truncf %7 : vector<128x256xf32> to vector<128x256xbf16>
    %c0_6 = arith.constant 0 : index
    %c0_7 = arith.constant 0 : index
    %9 = vector.load %arg4[%c0_6, %c0_7] : memref<256x256xbf16, #tpu.memory_space<vmem>>, vector<256x256xbf16>
    %cst_8 = arith.constant dense<0.000000e+00> : vector<128x256xf32>
    %10 = tpu.matmul %8, %9, %cst_8 {dimension_numbers = #tpu.dot_dimension_numbers<[1], [0], [0], [1], [0, 0, 1, 1], [], []>} : vector<128x256xbf16>, vector<256x256xbf16>, vector<128x256xf32> -> vector<128x256xf32>
    %c0_9 = arith.constant 0 : index
    %c0_10 = arith.constant 0 : index
    %11 = vector.load %arg5[%c0_9, %c0_10] : memref<1x256xf32, #tpu.memory_space<vmem>>, vector<1x256xf32>
    %12 = vector.broadcast %11 : vector<1x256xf32> to vector<128x256xf32>
    %13 = arith.addf %10, %12 : vector<128x256xf32>
    %cst_11 = arith.constant 0.000000e+00 : f32
    %14 = vector.broadcast %cst_11 : f32 to vector<128x256xf32>
    %15 = arith.maximumf %13, %14 : vector<128x256xf32>
    %c0_12 = arith.constant 0 : index
    %c0_13 = arith.constant 0 : index
    %16 = vector.load %arg6[%c0_12, %c0_13] : memref<2x256xbf16, #tpu.memory_space<vmem>>, vector<2x256xbf16>
    %17 = arith.truncf %15 : vector<128x256xf32> to vector<128x256xbf16>
    %cst_14 = arith.constant dense<0.000000e+00> : vector<2x128xf32>
    %18 = tpu.matmul %16, %17, %cst_14 {dimension_numbers = #tpu.dot_dimension_numbers<[1], [1], [0], [0], [0, 0, 1, 0], [], []>} : vector<2x256xbf16>, vector<128x256xbf16>, vector<2x128xf32> -> vector<2x128xf32>
    %c0_15 = arith.constant 0 : index
    %c0_16 = arith.constant 0 : index
    %19 = vector.load %arg7[%c0_15, %c0_16] : memref<2x1xf32, #tpu.memory_space<vmem>>, vector<2x1xf32>
    %20 = vector.broadcast %19 : vector<2x1xf32> to vector<2x128xf32>
    %21 = arith.addf %18, %20 : vector<2x128xf32>
    %c0_17 = arith.constant 0 : index
    %c0_18 = arith.constant 0 : index
    %22 = vector.load %arg8[%c0_17, %c0_18] : memref<2x128xf32, #tpu.memory_space<vmem>>, vector<2x128xf32>
    tpu.vector_store %arg8[%c0_17, %c0_18], %21 {strides = array<i32>} : memref<2x128xf32, #tpu.memory_space<vmem>>, vector<2x128xf32>,
    return
  }
  func.func @transform_0(%arg0: i32) -> (i32, i32) {
    %c0_i32 = arith.constant 0 : i32
    %c0_i32_0 = arith.constant 0 : i32
    return %arg0, %c0_i32 : i32, i32
  }
  func.func @transform_1(%arg0: i32) -> (i32, i32) {
    %c0_i32 = arith.constant 0 : i32
    %c0_i32_0 = arith.constant 0 : i32
    %c0_i32_1 = arith.constant 0 : i32
    return %c0_i32, %c0_i32_0 : i32, i32
  }
  func.func @transform_2(%arg0: i32) -> (i32, i32) {
    %c0_i32 = arith.constant 0 : i32
    %c0_i32_0 = arith.constant 0 : i32
    %c0_i32_1 = arith.constant 0 : i32
    return %c0_i32, %c0_i32_0 : i32, i32
  }
  func.func @transform_3(%arg0: i32) -> (i32, i32) {
    %c0_i32 = arith.constant 0 : i32
    %c0_i32_0 = arith.constant 0 : i32
    %c0_i32_1 = arith.constant 0 : i32
    return %c0_i32, %c0_i32_0 : i32, i32
  }
  func.func @transform_4(%arg0: i32) -> (i32, i32) {
    %c0_i32 = arith.constant 0 : i32
    %c0_i32_0 = arith.constant 0 : i32
    %c0_i32_1 = arith.constant 0 : i32
    return %c0_i32, %c0_i32_0 : i32, i32
  }
  func.func @transform_5(%arg0: i32) -> (i32, i32) {
    %c0_i32 = arith.constant 0 : i32
    %c0_i32_0 = arith.constant 0 : i32
    %c0_i32_1 = arith.constant 0 : i32
    return %c0_i32, %c0_i32_0 : i32, i32
  }
  func.func @transform_6(%arg0: i32) -> (i32, i32) {
    %c0_i32 = arith.constant 0 : i32
    %c0_i32_0 = arith.constant 0 : i32
    %c0_i32_1 = arith.constant 0 : i32
    return %c0_i32, %c0_i32_0 : i32, i32
  }
  func.func @transform_7(%arg0: i32) -> (i32, i32) {
    %c0_i32 = arith.constant 0 : i32
    %c0_i32_0 = arith.constant 0 : i32
    return %c0_i32, %arg0 : i32, i32
  }
}

</mosaic_0001>

<llo_original>
// kernel: tpu_custom_call.1
$region0: #{tpu_custom_call.1}
  #allocation0 [shape = 'u32[]', space=smem, size = 0x4, offset = 0x4, fixed_abs, tag = 'smem constant byte address 0x4 - core index']
  #allocation1 [shape = 'u32[144,128]{1,0:T(1,128)}', space=vmem, size = 0x12000, scoped, tag = 'internal scratch']
  %s0 = inlined_call_operand.vmem [shape: bf16[256,32], index: 0, kind: input, shape index: {}]
  %s1 = inlined_call_operand.vmem [shape: bf16[32,256], index: 1, kind: input, shape index: {}]
  %s2 = inlined_call_operand.vmem [shape: f32[1,256], index: 2, kind: input, shape index: {}]
  %s3 = inlined_call_operand.hbm [shape: bf16[256,256], index: 3, kind: input, shape index: {}]
  %s4 = inlined_call_operand.vmem [shape: f32[1,256], index: 4, kind: input, shape index: {}]
  %s5 = inlined_call_operand.vmem [shape: bf16[2,256], index: 5, kind: input, shape index: {}]
  %s6 = inlined_call_operand.vmem [shape: f32[2,1], index: 6, kind: input, shape index: {}]
  %s7 = inlined_call_operand.hbm [shape: f32[2,256], index: 7, kind: output, shape index: {}]
  %s8 = sld [smem:[#allocation0]]
  $region65: #{tpu_custom_call.1} parent=0
    _
  %s10 = ssub.s32 1, %s8
  %s11 = scalar_select 0, %s10, %s8
  $region1: #{tpu_custom_call.1} parent=0
    #allocation2 [shape = 'u8[131072]{0}', space=vmem, size = 0x20000, scoped, tag = 'input window, operand 3, single buffered']
    #allocation3 [shape = 's32[2]{0}', space=sflag, size = 0x8, scoped, tag = 'scoped memory for tpu_custom_call.1']
    #allocation4 [shape = 's32[2]{0}', space=sflag, size = 0x8, scoped, tag = 'scoped memory for tpu_custom_call.1']
    #allocation5 [shape = 'u8[2048]{0}', space=vmem, size = 0x800, scoped, tag = 'output window, operand 0']
    %12 = vsyncpa [#allocation3], 0
    %13 = vsyncpa [#allocation4], 0
    %s14 = scalar_lea.sflag [#allocation4], 1
    %15 = vsyncpa %s14, 0
    loop: start=0, step=1, limit=4
    $region2: #{tpu_custom_call.1} parent=1 // loop_pre_header
      _
    $region3: #{tpu_custom_call.1} parent=1 // loop_header
      %s17 = sphi 0, %s21
      %p18 = scmp.ge.s32.totalorder %s17, 4
      %s27 = sphi 0, %s29
      %s30 = sphi 0, %s27
      %s31 = sphi 0, %s30
      %s47 = sphi 0, %s31
      %s51 = sphi 0, %s51
      %s53 = sphi 0, %s51
      %s54 = sphi 0, %s53
      %s68 = sphi 0, %s54
      %s72 = sphi 0, %s72
      %s74 = sphi 0, %s72
      %s75 = sphi 0, %s74
      %s89 = sphi 0, %s75
      %s93 = sphi 0, %s93
      %s95 = sphi 0, %s93
      %s96 = sphi 0, %s95
      %s110 = sphi 0, %s96
      %s114 = sphi 0, %s114
      %s116 = sphi 0, %s114
      %s117 = sphi 0, %s116
      %s131 = sphi 0, %s117
      %s135 = sphi 0, %s135
      %s137 = sphi 0, %s135
      %s138 = sphi 0, %s137
      %s152 = sphi 0, %s138
      %s156 = sphi 0, %s156
      %s158 = sphi 0, %s156
      %s159 = sphi 0, %s158
      %s173 = sphi 0, %s159
      %s179 = sphi 0, %s181
      %s182 = sphi 0, %s179
      %s183 = sphi 0, %s182
      %s199 = sphi 0, %s183
    $region4: #{tpu_custom_call.1} parent=1 // loop_header_branch
      %20 = sbr.rel (%p18) target = $region8
    $region5: #{tpu_custom_call.1} parent=1 // loop_body
      %s22 = ssub.s32 %s17, 1
      %s23 = ssub.s32 %s17, 2
      %s24 = sadd.s32 %s17, 1
      %s25 = ssub.s32 %s17, %s24
      %p26 = scmp.eq.s32.totalorder %s25, 0
      %s28 = sadd.s32 %s27, 1
      %s29 = scalar_select %p26, %s27, %s28
      %p32 = pneg %p26
      %p33 = scmp.eq.s32.totalorder %s17, 1
      %p34 = por %p32, %p33
      %p35 = scmp.ne.s32.totalorder %s27, %s30
      %p36 = scmp.eq.s32.totalorder %s17, 0
      %p37 = por %p35, %p36
      %p38 = scmp.ne.s32.totalorder %s27, %s30
      %p39 = scmp.eq.s32.totalorder %s22, 1
      %p40 = por %p38, %p39
      %p41 = scmp.ne.s32.totalorder %s30, %s31
      %p42 = scmp.eq.s32.totalorder %s22, 0
      %p43 = por %p41, %p42
      %p44 = scmp.ne.s32.totalorder %s30, %s31
      %p45 = scmp.eq.s32.totalorder %s23, 1
      %p46 = por %p44, %p45
      %p48 = scmp.ne.s32.totalorder %s31, %s47
      %p49 = scmp.eq.s32.totalorder %s23, 0
      %p50 = por %p48, %p49
      %s52 = sadd.s32 %s51, 1
      %p55 = scmp.eq.s32.totalorder %s17, 1
      %p56 = scmp.ne.s32.totalorder %s51, %s53
      %p57 = scmp.eq.s32.totalorder %s17, 0
      %p58 = por %p56, %p57
      %p59 = scmp.ne.s32.totalorder %s51, %s53
      %p60 = scmp.eq.s32.totalorder %s22, 1
      %p61 = por %p59, %p60
      %p62 = scmp.ne.s32.totalorder %s53, %s54
      %p63 = scmp.eq.s32.totalorder %s22, 0
      %p64 = por %p62, %p63
      %p65 = scmp.ne.s32.totalorder %s53, %s54
      %p66 = scmp.eq.s32.totalorder %s23, 1
      %p67 = por %p65, %p66
      %p69 = scmp.ne.s32.totalorder %s54, %s68
      %p70 = scmp.eq.s32.totalorder %s23, 0
      %p71 = por %p69, %p70
      %s73 = sadd.s32 %s72, 1
      %p76 = scmp.eq.s32.totalorder %s17, 1
      %p77 = scmp.ne.s32.totalorder %s72, %s74
      %p78 = scmp.eq.s32.totalorder %s17, 0
      %p79 = por %p77, %p78
      %p80 = scmp.ne.s32.totalorder %s72, %s74
      %p81 = scmp.eq.s32.totalorder %s22, 1
      %p82 = por %p80, %p81
      %p83 = scmp.ne.s32.totalorder %s74, %s75
      %p84 = scmp.eq.s32.totalorder %s22, 0
      %p85 = por %p83, %p84
      %p86 = scmp.ne.s32.totalorder %s74, %s75
      %p87 = scmp.eq.s32.totalorder %s23, 1
      %p88 = por %p86, %p87
      %p90 = scmp.ne.s32.totalorder %s75, %s89
      %p91 = scmp.eq.s32.totalorder %s23, 0
      %p92 = por %p90, %p91
      %s94 = sadd.s32 %s93, 1
      %p97 = scmp.eq.s32.totalorder %s17, 1
      %p98 = scmp.ne.s32.totalorder %s93, %s95
      %p99 = scmp.eq.s32.totalorder %s17, 0
      %p100 = por %p98, %p99
      %p101 = scmp.ne.s32.totalorder %s93, %s95
      %p102 = scmp.eq.s32.totalorder %s22, 1
      %p103 = por %p101, %p102
      %p104 = scmp.ne.s32.totalorder %s95, %s96
      %p105 = scmp.eq.s32.totalorder %s22, 0
      %p106 = por %p104, %p105
      %p107 = scmp.ne.s32.totalorder %s95, %s96
      %p108 = scmp.eq.s32.totalorder %s23, 1
      %p109 = por %p107, %p108
      %p111 = scmp.ne.s32.totalorder %s96, %s110
      %p112 = scmp.eq.s32.totalorder %s23, 0
      %p113 = por %p111, %p112
      %s115 = sadd.s32 %s114, 1
      %p118 = scmp.eq.s32.totalorder %s17, 1
      %p119 = scmp.ne.s32.totalorder %s114, %s116
      %p120 = scmp.eq.s32.totalorder %s17, 0
      %p121 = por %p119, %p120
      %p122 = scmp.ne.s32.totalorder %s114, %s116
      %p123 = scmp.eq.s32.totalorder %s22, 1
      %p124 = por %p122, %p123
      %p125 = scmp.ne.s32.totalorder %s116, %s117
      %p126 = scmp.eq.s32.totalorder %s22, 0
      %p127 = por %p125, %p126
      %p128 = scmp.ne.s32.totalorder %s116, %s117
      %p129 = scmp.eq.s32.totalorder %s23, 1
      %p130 = por %p128, %p129
      %p132 = scmp.ne.s32.totalorder %s117, %s131
      %p133 = scmp.eq.s32.totalorder %s23, 0
      %p134 = por %p132, %p133
      %s136 = sadd.s32 %s135, 1
      %p139 = scmp.eq.s32.totalorder %s17, 1
      %p140 = scmp.ne.s32.totalorder %s135, %s137
      %p141 = scmp.eq.s32.totalorder %s17, 0
      %p142 = por %p140, %p141
      %p143 = scmp.ne.s32.totalorder %s135, %s137
      %p144 = scmp.eq.s32.totalorder %s22, 1
      %p145 = por %p143, %p144
      %p146 = scmp.ne.s32.totalorder %s137, %s138
      %p147 = scmp.eq.s32.totalorder %s22, 0
      %p148 = por %p146, %p147
      %p149 = scmp.ne.s32.totalorder %s137, %s138
      %p150 = scmp.eq.s32.totalorder %s23, 1
      %p151 = por %p149, %p150
      %p153 = scmp.ne.s32.totalorder %s138, %s152
      %p154 = scmp.eq.s32.totalorder %s23, 0
      %p155 = por %p153, %p154
      %s157 = sadd.s32 %s156, 1
      %p160 = scmp.eq.s32.totalorder %s17, 1
      %p161 = scmp.ne.s32.totalorder %s156, %s158
      %p162 = scmp.eq.s32.totalorder %s17, 0
      %p163 = por %p161, %p162
      %p164 = scmp.ne.s32.totalorder %s156, %s158
      %p165 = scmp.eq.s32.totalorder %s22, 1
      %p166 = por %p164, %p165
      %p167 = scmp.ne.s32.totalorder %s158, %s159
      %p168 = scmp.eq.s32.totalorder %s22, 0
      %p169 = por %p167, %p168
      %p170 = scmp.ne.s32.totalorder %s158, %s159
      %p171 = scmp.eq.s32.totalorder %s23, 1
      %p172 = por %p170, %p171
      %p174 = scmp.ne.s32.totalorder %s159, %s173
      %p175 = scmp.eq.s32.totalorder %s23, 0
      %p176 = por %p174, %p175
      %s177 = ssub.s32 %s17, %s24
      %p178 = scmp.eq.s32.totalorder %s177, 0
      %s180 = sadd.s32 %s179, 1
      %s181 = scalar_select %p178, %s179, %s180
      %p184 = pneg %p178
      %p185 = scmp.eq.s32.totalorder %s17, 1
      %p186 = por %p184, %p185
      %p187 = scmp.ne.s32.totalorder %s179, %s182
      %p188 = scmp.eq.s32.totalorder %s17, 0
      %p189 = por %p187, %p188
      %p190 = scmp.ne.s32.totalorder %s179, %s182
      %p191 = scmp.eq.s32.totalorder %s22, 1
      %p192 = por %p190, %p191
      %p193 = scmp.ne.s32.totalorder %s182, %s183
      %p194 = scmp.eq.s32.totalorder %s22, 0
      %p195 = por %p193, %p194
      %p196 = scmp.ne.s32.totalorder %s182, %s183
      %p197 = scmp.eq.s32.totalorder %s23, 1
      %p198 = por %p196, %p197
      %p200 = scmp.ne.s32.totalorder %s183, %s199
      %p201 = scmp.eq.s32.totalorder %s23, 0
      %p202 = por %p200, %p201
      %p203 = scmp.le.s32.totalorder 1, %s17
      %p204 = scmp.lt.s32.totalorder %s17, 3
      %p205 = pnand %p203, %p204
      %p206 = pneg %p205
      // Predicated region
      $region9: #{tpu_custom_call.1} parent=5 // pred_check
        _
      $region10: #{tpu_custom_call.1} parent=5 // pred_check_branch
        %208 = sbr.rel (%p205) target = $region12
      $region11: #{tpu_custom_call.1} parent=5 // pred_region
        %s209 = ssub.s32 %s17, 1
        // Predicated region
        $region13: #{tpu_custom_call.1} parent=11 // pred_check
          %p210 = pneg %p64
        $region14: #{tpu_custom_call.1} parent=11 // pred_check_branch
          %212 = sbr.rel (%p210) target = $region16
        $region15: #{tpu_custom_call.1} parent=11 // pred_region
          _
        $region16: #{tpu_custom_call.1} parent=11 // pred_fallthru
          _
        // Predicated region
        $region17: #{tpu_custom_call.1} parent=11 // pred_check
          %p213 = pneg %p85
        $region18: #{tpu_custom_call.1} parent=11 // pred_check_branch
          %215 = sbr.rel (%p213) target = $region20
        $region19: #{tpu_custom_call.1} parent=11 // pred_region
          _
        $region20: #{tpu_custom_call.1} parent=11 // pred_fallthru
          _
        // Predicated region
        $region21: #{tpu_custom_call.1} parent=11 // pred_check
          %p216 = pneg %p106
        $region22: #{tpu_custom_call.1} parent=11 // pred_check_branch
          %218 = sbr.rel (%p216) target = $region24
        $region23: #{tpu_custom_call.1} parent=11 // pred_region
          %s220 = ssub.s32 4096, 4096
          %221 = vsyncadd [#allocation3], %s220
          %s222 = sshll.u32 [#allocation2], 4
          %s223 = int_to_ptr.vmem [resolvable:$true] %s222
          %228 = dma.hbm_to_vmem [thread:$0]  %s3, 4096, %s223, [#allocation3], 128, 128, 8
        $region24: #{tpu_custom_call.1} parent=11 // pred_fallthru
          _
        // Predicated region
        $region25: #{tpu_custom_call.1} parent=11 // pred_check
          %p229 = pneg %p127
        $region26: #{tpu_custom_call.1} parent=11 // pred_check_branch
          %231 = sbr.rel (%p229) target = $region28
        $region27: #{tpu_custom_call.1} parent=11 // pred_region
          _
        $region28: #{tpu_custom_call.1} parent=11 // pred_fallthru
          _
        // Predicated region
        $region29: #{tpu_custom_call.1} parent=11 // pred_check
          %p232 = pneg %p148
        $region30: #{tpu_custom_call.1} parent=11 // pred_check_branch
          %234 = sbr.rel (%p232) target = $region32
        $region31: #{tpu_custom_call.1} parent=11 // pred_region
          _
        $region32: #{tpu_custom_call.1} parent=11 // pred_fallthru
          _
        // Predicated region
        $region33: #{tpu_custom_call.1} parent=11 // pred_check
          %p235 = pneg %p169
        $region34: #{tpu_custom_call.1} parent=11 // pred_check_branch
          %237 = sbr.rel (%p235) target = $region36
        $region35: #{tpu_custom_call.1} parent=11 // pred_region
          _
        $region36: #{tpu_custom_call.1} parent=11 // pred_fallthru
          _
      $region12: #{tpu_custom_call.1} parent=5 // pred_fallthru
        _
      %p238 = scmp.lt.s32.totalorder %s17, 2
      // Predicated region
      $region37: #{tpu_custom_call.1} parent=5 // pred_check
        %p239 = pneg %p238
      $region38: #{tpu_custom_call.1} parent=5 // pred_check_branch
        %241 = sbr.rel (%p239) target = $region40
      $region39: #{tpu_custom_call.1} parent=5 // pred_region
        // Predicated region
        $region41: #{tpu_custom_call.1} parent=39 // pred_check
          %p242 = pneg %p37
        $region42: #{tpu_custom_call.1} parent=39 // pred_check_branch
          %244 = sbr.rel (%p242) target = $region44
        $region43: #{tpu_custom_call.1} parent=39 // pred_region
          %s245 = smul.u32 16, %s17
          %p246 = scmp.lt.s32.totalorder %s245, 31
          %s247 = scalar_select %p246, %s245, 31
          %s248 = smul.addr %s247, 4
          %s249 = scalar_lea.vmem %s0, %s248
          %s250 = smul.u32 16, %s17
        $region44: #{tpu_custom_call.1} parent=39 // pred_fallthru
          _
      $region40: #{tpu_custom_call.1} parent=5 // pred_fallthru
        _
      %p251 = scmp.le.s32.totalorder 1, %s17
      %p252 = scmp.lt.s32.totalorder %s17, 3
      %p253 = pnand %p251, %p252
      %p254 = pneg %p253
      // Predicated region
      $region45: #{tpu_custom_call.1} parent=5 // pred_check
        _
      $region46: #{tpu_custom_call.1} parent=5 // pred_check_branch
        %256 = sbr.rel (%p253) target = $region48
      $region47: #{tpu_custom_call.1} parent=5 // pred_region
        %s257 = ssub.s32 %s17, 1
        // Predicated region
        $region49: #{tpu_custom_call.1} parent=47 // pred_check
          %p258 = pneg %p106
        $region50: #{tpu_custom_call.1} parent=47 // pred_check_branch
          %260 = sbr.rel (%p258) target = $region52
        $region51: #{tpu_custom_call.1} parent=47 // pred_region
          %261 = dma.done [#allocation3], 4096
        $region52: #{tpu_custom_call.1} parent=47 // pred_fallthru
          _
        %s262 = smul.u32 16, %s22
        %p263 = scmp.lt.s32.totalorder %s262, 31
        %s264 = scalar_select %p263, %s262, 31
        %s265 = smul.addr %s264, 4
        %s266 = scalar_lea.vmem %s0, %s265
        %p267 = pneg %p43
        %p268 = pneg %p40
        %p269 = pneg %p64
        %p270 = pneg %p61
        %p271 = pneg %p85
        %p272 = pneg %p82
        %p273 = pneg %p106
        %p274 = pneg %p103
        %p275 = pneg %p127
        %p276 = pneg %p124
        %p277 = pneg %p148
        %p278 = pneg %p145
        %p279 = pneg %p169
        %p280 = pneg %p166
        %p281 = pneg %p195
        %p282 = pneg %p192
        %s283 = sand.u32 %s182, 1
        %s284 = scalar_lea.sflag [#allocation4], %s283
        %s285 = sand.u32 %s182, 1
        %s286 = smul.addr %s285, 2
        %s287 = scalar_lea.vmem [#allocation5], %s286
        %s288 = smul.u32 16, %s22
        %p289 = scmp.lt.s32.totalorder %s288, 31
        %s290 = scalar_select %p289, %s288, 31
        %s291 = smul.addr %s290, 4
        %s292 = scalar_lea.vmem %s0, %s291
        %s293 = smul.u32 16, %s22
        %v295 = vld [vmem:[%s292] sm:$0xf]
        %v296 = vld [vmem:[%s292 + $0x4] sm:$0xf]
        %v297 = vld [vmem:[%s292 + $0x8] sm:$0xf]
        %v298 = vld [vmem:[%s292 + $0xc] sm:$0xf]
        %v299 = vld [vmem:[%s292 + $0x10] sm:$0xf]
        %v300 = vld [vmem:[%s292 + $0x14] sm:$0xf]
        %v301 = vld [vmem:[%s292 + $0x18] sm:$0xf]
        %v302 = vld [vmem:[%s292 + $0x1c] sm:$0xf]
        %v303 = vld [vmem:[%s292 + $0x20] sm:$0xf]
        %v304 = vld [vmem:[%s292 + $0x24] sm:$0xf]
        %v305 = vld [vmem:[%s292 + $0x28] sm:$0xf]
        %v306 = vld [vmem:[%s292 + $0x2c] sm:$0xf]
        %v307 = vld [vmem:[%s292 + $0x30] sm:$0xf]
        %v308 = vld [vmem:[%s292 + $0x34] sm:$0xf]
        %v309 = vld [vmem:[%s292 + $0x38] sm:$0xf]
        %v310 = vld [vmem:[%s292 + $0x3c] sm:$0xf]
        %v311 = vld [vmem:[%s1] sm:$0xff]
        %v312 = vld [vmem:[%s1 + $0x8] sm:$0xff]
        %v313 = vld [vmem:[%s1 + $0x10] sm:$0xff]
        %v314 = vld [vmem:[%s1 + $0x18] sm:$0xff]
        %v315 = vld [vmem:[%s2] sm:$0x3]
        %v317 = vlaneseq
        %v318 = vshrl.u32 %v317, 7
        %v319 = vsub.s32 0, %v318
        %v320 = vrot.slane %v315, %v319
        %v321 = vlaneseq
        %v322 = vshrl.u32 %v321, 7
        %v323 = vsub.s32 1, %v322
        %v324 = vrot.slane %v315, %v323
        %v343 = vunpack.c.l.b16 %v295
        %v344 = vunpack.c.l.b16 %v296
        %v345 = vunpack.c.l.b16 %v297
        %v346 = vunpack.c.l.b16 %v298
        %v347 = vunpack.c.l.b16 %v299
        %v348 = vunpack.c.l.b16 %v300
        %v349 = vunpack.c.l.b16 %v301
        %v350 = vunpack.c.l.b16 %v302
        %v351 = vunpack.c.l.b16 %v303
        %v352 = vunpack.c.l.b16 %v304
        %v353 = vunpack.c.l.b16 %v305
        %v354 = vunpack.c.l.b16 %v306
        %v355 = vunpack.c.l.b16 %v307
        %v356 = vunpack.c.l.b16 %v308
        %v357 = vunpack.c.l.b16 %v309
        %v358 = vunpack.c.l.b16 %v310
        %v359 = vpack.c.b16 %v344, %v343
        %v360 = vpack.c.b16 %v346, %v345
        %v361 = vpack.c.b16 %v348, %v347
        %v362 = vpack.c.b16 %v350, %v349
        %v363 = vpack.c.b16 %v352, %v351
        %v364 = vpack.c.b16 %v354, %v353
        %v365 = vpack.c.b16 %v356, %v355
        %v366 = vpack.c.b16 %v358, %v357
        %v371 = vunpack.c.l.b16 %v311
        %v372 = vunpack.c.h.b16 %v311
        %v373 = vunpack.c.l.b16 %v312
        %v374 = vunpack.c.h.b16 %v312
        %v375 = vunpack.c.l.b16 %v313
        %v376 = vunpack.c.h.b16 %v313
        %v377 = vunpack.c.l.b16 %v314
        %v378 = vunpack.c.h.b16 %v314
        %v379 = vpack.c.b16 %v373, %v371
        %v380 = vpack.c.b16 %v374, %v372
        %v381 = vpack.c.b16 %v377, %v375
        %v382 = vpack.c.b16 %v378, %v376
        %vm387 = vcmask 261120
        %v389 = vsel %vm387, %v359, 0
        %v392 = vsel %vm387, %v360, 0
        %v395 = vsel %vm387, %v361, 0
        %v398 = vsel %vm387, %v362, 0
        %v401 = vsel %vm387, %v363, 0
        %v404 = vsel %vm387, %v364, 0
        %v407 = vsel %vm387, %v365, 0
        %v410 = vsel %vm387, %v366, 0
        %412 = vmatprep.subr.bf16.mxu0 %v380
        %413 = vmatpush1.bf16.msra.mxu0 %v379
        %414 = vmatprep.subr.bf16.mxu0 %v382
        %415 = vmatpush1.bf16.msra.mxu0 %v381
        %416 = vmatprep.subr.bf16.mxu0 0
        %417 = vmatpush1.bf16.msra.mxu0 0
        %418 = vmatprep.subr.bf16.mxu0 0
        %419 = vmatpush1.bf16.msra.mxu0 0
        %420 = vmatprep.subr.bf16.mxu0 0
        %421 = vmatpush1.bf16.msra.mxu0 0
        %422 = vmatprep.subr.bf16.mxu0 0
        %423 = vmatpush1.bf16.msra.mxu0 0
        %424 = vmatprep.subr.bf16.mxu0 0
        %425 = vmatpush1.bf16.msra.mxu0 0
        %426 = vmatprep.subr.bf16.mxu0 0
        %427 = vmatpush1.bf16.msra.mxu0 0
        %428 = vmatprep.subr.bf16.mxu0 0
        %429 = vmatpush1.bf16.msra.mxu0 0
        %430 = vmatprep.subr.bf16.mxu0 0
        %431 = vmatpush1.bf16.msra.mxu0 0
        %432 = vmatprep.subr.bf16.mxu0 0
        %433 = vmatpush1.bf16.msra.mxu0 0
        %434 = vmatprep.subr.bf16.mxu0 0
        %435 = vmatpush1.bf16.msra.mxu0 0
        %436 = vmatprep.subr.bf16.mxu0 0
        %437 = vmatpush1.bf16.msra.mxu0 0
        %438 = vmatprep.subr.bf16.mxu0 0
        %439 = vmatpush1.bf16.msra.mxu0 0
        %440 = vmatprep.subr.bf16.mxu0 0
        %441 = vmatpush1.bf16.msra.mxu0 0
        %442 = vmatprep.subr.bf16.mxu0 0
        %443 = vmatpush1.bf16.msra.mxu0 0
        %444 = vmatprep.mubr.bf16.mxu0 0
        %445 = vmatmul.mubr.bf16.gmra.mrb[0].mxu0 %v389
        %v446 = vpop.f32.mrb[0].mxu0
        %v447 = vadd.f32 %v320, %v446
        %v448 = vpop.f32.mrb[0].mxu0
        %v449 = vadd.f32 %v324, %v448
        %v450 = vpop.f32.mrb[0].mxu0
        %v451 = vadd.f32 %v320, %v450
        %v452 = vpop.f32.mrb[0].mxu0
        %v453 = vadd.f32 %v324, %v452
        %454 = vmatprep.mubr.bf16.mxu0 0
        %455 = vmatmul.mubr.bf16.gmra.mrb[0].mxu0 %v392
        %v456 = vpop.f32.mrb[0].mxu0
        %v457 = vadd.f32 %v320, %v456
        %v458 = vpop.f32.mrb[0].mxu0
        %v459 = vadd.f32 %v324, %v458
        %v460 = vpop.f32.mrb[0].mxu0
        %v461 = vadd.f32 %v320, %v460
        %v462 = vpop.f32.mrb[0].mxu0
        %v463 = vadd.f32 %v324, %v462
        %464 = vmatprep.mubr.bf16.mxu0 0
        %465 = vmatmul.mubr.bf16.gmra.mrb[0].mxu0 %v395
        %v466 = vpop.f32.mrb[0].mxu0
        %v467 = vadd.f32 %v320, %v466
        %v468 = vpop.f32.mrb[0].mxu0
        %v469 = vadd.f32 %v324, %v468
        %v470 = vpop.f32.mrb[0].mxu0
        %v471 = vadd.f32 %v320, %v470
        %v472 = vpop.f32.mrb[0].mxu0
        %v473 = vadd.f32 %v324, %v472
        %474 = vmatprep.mubr.bf16.mxu0 0
        %475 = vmatmul.mubr.bf16.gmra.mrb[0].mxu0 %v398
        %v476 = vpop.f32.mrb[0].mxu0
        %v477 = vadd.f32 %v320, %v476
        %v478 = vpop.f32.mrb[0].mxu0
        %v479 = vadd.f32 %v324, %v478
        %v480 = vpop.f32.mrb[0].mxu0
        %v481 = vadd.f32 %v320, %v480
        %v482 = vpop.f32.mrb[0].mxu0
        %v483 = vadd.f32 %v324, %v482
        %484 = vmatprep.mubr.bf16.mxu0 0
        %485 = vmatmul.mubr.bf16.gmra.mrb[0].mxu0 %v401
        %v486 = vpop.f32.mrb[0].mxu0
        %v487 = vadd.f32 %v320, %v486
        %v488 = vpop.f32.mrb[0].mxu0
        %v489 = vadd.f32 %v324, %v488
        %v490 = vpop.f32.mrb[0].mxu0
        %v491 = vadd.f32 %v320, %v490
        %v492 = vpop.f32.mrb[0].mxu0
        %v493 = vadd.f32 %v324, %v492
        %494 = vmatprep.mubr.bf16.mxu0 0
        %495 = vmatmul.mubr.bf16.gmra.mrb[0].mxu0 %v404
        %v496 = vpop.f32.mrb[0].mxu0
        %v497 = vadd.f32 %v320, %v496
        %v498 = vpop.f32.mrb[0].mxu0
        %v499 = vadd.f32 %v324, %v498
        %v500 = vpop.f32.mrb[0].mxu0
        %v501 = vadd.f32 %v320, %v500
        %v502 = vpop.f32.mrb[0].mxu0
        %v503 = vadd.f32 %v324, %v502
        %504 = vmatprep.mubr.bf16.mxu0 0
        %505 = vmatmul.mubr.bf16.gmra.mrb[0].mxu0 %v407
        %v506 = vpop.f32.mrb[0].mxu0
        %v507 = vadd.f32 %v320, %v506
        %v508 = vpop.f32.mrb[0].mxu0
        %v509 = vadd.f32 %v324, %v508
        %v510 = vpop.f32.mrb[0].mxu0
        %v511 = vadd.f32 %v320, %v510
        %v512 = vpop.f32.mrb[0].mxu0
        %v513 = vadd.f32 %v324, %v512
        %514 = vmatprep.mubr.bf16.mxu0 0
        %515 = vmatmul.mubr.bf16.gmra.mrb[0].mxu0 %v410
        %v516 = vpop.f32.mrb[0].mxu0
        %v517 = vadd.f32 %v320, %v516
        %v518 = vpop.f32.mrb[0].mxu0
        %v519 = vadd.f32 %v324, %v518
        %v520 = vpop.f32.mrb[0].mxu0
        %v521 = vadd.f32 %v320, %v520
        %v522 = vpop.f32.mrb[0].mxu0
        %v523 = vadd.f32 %v324, %v522
        %524 = vdwg.mxu0
        %v525 = vmax.f32 %v447, 0.0
        %v526 = vmax.f32 %v449, 0.0
        %v527 = vmax.f32 %v451, 0.0
        %v528 = vmax.f32 %v453, 0.0
        %v529 = vmax.f32 %v457, 0.0
        %v530 = vmax.f32 %v459, 0.0
        %v531 = vmax.f32 %v461, 0.0
        %v532 = vmax.f32 %v463, 0.0
        %v533 = vmax.f32 %v467, 0.0
        %v534 = vmax.f32 %v469, 0.0
        %v535 = vmax.f32 %v471, 0.0
        %v536 = vmax.f32 %v473, 0.0
        %v537 = vmax.f32 %v477, 0.0
        %v538 = vmax.f32 %v479, 0.0
        %v539 = vmax.f32 %v481, 0.0
        %v540 = vmax.f32 %v483, 0.0
        %v541 = vmax.f32 %v487, 0.0
        %v542 = vmax.f32 %v489, 0.0
        %v543 = vmax.f32 %v491, 0.0
        %v544 = vmax.f32 %v493, 0.0
        %v545 = vmax.f32 %v497, 0.0
        %v546 = vmax.f32 %v499, 0.0
        %v547 = vmax.f32 %v501, 0.0
        %v548 = vmax.f32 %v503, 0.0
        %v549 = vmax.f32 %v507, 0.0
        %v550 = vmax.f32 %v509, 0.0
        %v551 = vmax.f32 %v511, 0.0
        %v552 = vmax.f32 %v513, 0.0
        %v553 = vmax.f32 %v517, 0.0
        %v554 = vmax.f32 %v519, 0.0
        %v555 = vmax.f32 %v521, 0.0
        %v556 = vmax.f32 %v523, 0.0
        %v557 = vpack.c.bf16 %v527, %v525
        %v558 = vpack.c.bf16 %v528, %v526
        %v559 = vpack.c.bf16 %v531, %v529
        %v560 = vpack.c.bf16 %v532, %v530
        %v561 = vpack.c.bf16 %v535, %v533
        %v562 = vpack.c.bf16 %v536, %v534
        %v563 = vpack.c.bf16 %v539, %v537
        %v564 = vpack.c.bf16 %v540, %v538
        %v565 = vpack.c.bf16 %v543, %v541
        %v566 = vpack.c.bf16 %v544, %v542
        %v567 = vpack.c.bf16 %v547, %v545
        %v568 = vpack.c.bf16 %v548, %v546
        %v569 = vpack.c.bf16 %v551, %v549
        %v570 = vpack.c.bf16 %v552, %v550
        %v571 = vpack.c.bf16 %v555, %v553
        %v572 = vpack.c.bf16 %v556, %v554
        %v573 = vld [vmem:[#allocation2] sm:$0xff]
        %v574 = vld [vmem:[#allocation2 + $0x8] sm:$0xff]
        %v575 = vld [vmem:[#allocation2 + $0x10] sm:$0xff]
        %v576 = vld [vmem:[#allocation2 + $0x18] sm:$0xff]
        %v577 = vld [vmem:[#allocation2 + $0x20] sm:$0xff]
        %v578 = vld [vmem:[#allocation2 + $0x28] sm:$0xff]
        %v579 = vld [vmem:[#allocation2 + $0x30] sm:$0xff]
        %v580 = vld [vmem:[#allocation2 + $0x38] sm:$0xff]
        %v581 = vld [vmem:[#allocation2 + $0x40] sm:$0xff]
        %v582 = vld [vmem:[#allocation2 + $0x48] sm:$0xff]
        %v583 = vld [vmem:[#allocation2 + $0x50] sm:$0xff]
        %v584 = vld [vmem:[#allocation2 + $0x58] sm:$0xff]
        %v585 = vld [vmem:[#allocation2 + $0x60] sm:$0xff]
        %v586 = vld [vmem:[#allocation2 + $0x68] sm:$0xff]
        %v587 = vld [vmem:[#allocation2 + $0x70] sm:$0xff]
        %v588 = vld [vmem:[#allocation2 + $0x78] sm:$0xff]
        %v589 = vld [vmem:[#allocation2 + $0x80] sm:$0xff]
        %v590 = vld [vmem:[#allocation2 + $0x88] sm:$0xff]
        %v591 = vld [vmem:[#allocation2 + $0x90] sm:$0xff]
        %v592 = vld [vmem:[#allocation2 + $0x98] sm:$0xff]
        %v593 = vld [vmem:[#allocation2 + $0xa0] sm:$0xff]
        %v594 = vld [vmem:[#allocation2 + $0xa8] sm:$0xff]
        %v595 = vld [vmem:[#allocation2 + $0xb0] sm:$0xff]
        %v596 = vld [vmem:[#allocation2 + $0xb8] sm:$0xff]
        %v597 = vld [vmem:[#allocation2 + $0xc0] sm:$0xff]
        %v598 = vld [vmem:[#allocation2 + $0xc8] sm:$0xff]
        %v599 = vld [vmem:[#allocation2 + $0xd0] sm:$0xff]
        %v600 = vld [vmem:[#allocation2 + $0xd8] sm:$0xff]
        %v601 = vld [vmem:[#allocation2 + $0xe0] sm:$0xff]
        %v602 = vld [vmem:[#allocation2 + $0xe8] sm:$0xff]
        %v603 = vld [vmem:[#allocation2 + $0xf0] sm:$0xff]
        %v604 = vld [vmem:[#allocation2 + $0xf8] sm:$0xff]
        %v605 = vld [vmem:[%s4] sm:$0x3]
        %v607 = vlaneseq
        %v608 = vshrl.u32 %v607, 7
        %v609 = vsub.s32 0, %v608
        %v610 = vrot.slane %v605, %v609
        %v611 = vlaneseq
        %v612 = vshrl.u32 %v611, 7
        %v613 = vsub.s32 1, %v612
        %v614 = vrot.slane %v605, %v613
        %v649 = vunpack.c.l.b16 %v573
        %v650 = vunpack.c.h.b16 %v573
        %v651 = vunpack.c.l.b16 %v574
        %v652 = vunpack.c.h.b16 %v574
        %v653 = vunpack.c.l.b16 %v575
        %v654 = vunpack.c.h.b16 %v575
        %v655 = vunpack.c.l.b16 %v576
        %v656 = vunpack.c.h.b16 %v576
        %v657 = vunpack.c.l.b16 %v577
        %v658 = vunpack.c.h.b16 %v577
        %v659 = vunpack.c.l.b16 %v578
        %v660 = vunpack.c.h.b16 %v578
        %v661 = vunpack.c.l.b16 %v579
        %v662 = vunpack.c.h.b16 %v579
        %v663 = vunpack.c.l.b16 %v580
        %v664 = vunpack.c.h.b16 %v580
        %v665 = vunpack.c.l.b16 %v581
        %v666 = vunpack.c.h.b16 %v581
        %v667 = vunpack.c.l.b16 %v582
        %v668 = vunpack.c.h.b16 %v582
        %v669 = vunpack.c.l.b16 %v583
        %v670 = vunpack.c.h.b16 %v583
        %v671 = vunpack.c.l.b16 %v584
        %v672 = vunpack.c.h.b16 %v584
        %v673 = vunpack.c.l.b16 %v585
        %v674 = vunpack.c.h.b16 %v585
        %v675 = vunpack.c.l.b16 %v586
        %v676 = vunpack.c.h.b16 %v586
        %v677 = vunpack.c.l.b16 %v587
        %v678 = vunpack.c.h.b16 %v587
        %v679 = vunpack.c.l.b16 %v588
        %v680 = vunpack.c.h.b16 %v588
        %v681 = vunpack.c.l.b16 %v589
        %v682 = vunpack.c.h.b16 %v589
        %v683 = vunpack.c.l.b16 %v590
        %v684 = vunpack.c.h.b16 %v590
        %v685 = vunpack.c.l.b16 %v591
        %v686 = vunpack.c.h.b16 %v591
        %v687 = vunpack.c.l.b16 %v592
        %v688 = vunpack.c.h.b16 %v592
        %v689 = vunpack.c.l.b16 %v593
        %v690 = vunpack.c.h.b16 %v593
        %v691 = vunpack.c.l.b16 %v594
        %v692 = vunpack.c.h.b16 %v594
        %v693 = vunpack.c.l.b16 %v595
        %v694 = vunpack.c.h.b16 %v595
        %v695 = vunpack.c.l.b16 %v596
        %v696 = vunpack.c.h.b16 %v596
        %v697 = vunpack.c.l.b16 %v597
        %v698 = vunpack.c.h.b16 %v597
        %v699 = vunpack.c.l.b16 %v598
        %v700 = vunpack.c.h.b16 %v598
        %v701 = vunpack.c.l.b16 %v599
        %v702 = vunpack.c.h.b16 %v599
        %v703 = vunpack.c.l.b16 %v600
        %v704 = vunpack.c.h.b16 %v600
        %v705 = vunpack.c.l.b16 %v601
        %v706 = vunpack.c.h.b16 %v601
        %v707 = vunpack.c.l.b16 %v602
        %v708 = vunpack.c.h.b16 %v602
        %v709 = vunpack.c.l.b16 %v603
        %v710 = vunpack.c.h.b16 %v603
        %v711 = vunpack.c.l.b16 %v604
        %v712 = vunpack.c.h.b16 %v604
        %v713 = vpack.c.b16 %v651, %v649
        %v714 = vpack.c.b16 %v652, %v650
        %v715 = vpack.c.b16 %v655, %v653
        %v716 = vpack.c.b16 %v656, %v654
        %v717 = vpack.c.b16 %v659, %v657
        %v718 = vpack.c.b16 %v660, %v658
        %v719 = vpack.c.b16 %v663, %v661
        %v720 = vpack.c.b16 %v664, %v662
        %v721 = vpack.c.b16 %v667, %v665
        %v722 = vpack.c.b16 %v668, %v666
        %v723 = vpack.c.b16 %v671, %v669
        %v724 = vpack.c.b16 %v672, %v670
        %v725 = vpack.c.b16 %v675, %v673
        %v726 = vpack.c.b16 %v676, %v674
        %v727 = vpack.c.b16 %v679, %v677
        %v728 = vpack.c.b16 %v680, %v678
        %v729 = vpack.c.b16 %v683, %v681
        %v730 = vpack.c.b16 %v684, %v682
        %v731 = vpack.c.b16 %v687, %v685
        %v732 = vpack.c.b16 %v688, %v686
        %v733 = vpack.c.b16 %v691, %v689
        %v734 = vpack.c.b16 %v692, %v690
        %v735 = vpack.c.b16 %v695, %v693
        %v736 = vpack.c.b16 %v696, %v694
        %v737 = vpack.c.b16 %v699, %v697
        %v738 = vpack.c.b16 %v700, %v698
        %v739 = vpack.c.b16 %v703, %v701
        %v740 = vpack.c.b16 %v704, %v702
        %v741 = vpack.c.b16 %v707, %v705
        %v742 = vpack.c.b16 %v708, %v706
        %v743 = vpack.c.b16 %v711, %v709
        %v744 = vpack.c.b16 %v712, %v710
        %777 = vmatprep.subr.bf16.mxu0 %v714
        %778 = vmatpush1.bf16.msra.mxu0 %v713
        %779 = vmatprep.subr.bf16.mxu0 %v716
        %780 = vmatpush1.bf16.msra.mxu0 %v715
        %781 = vmatprep.subr.bf16.mxu0 %v718
        %782 = vmatpush1.bf16.msra.mxu0 %v717
        %783 = vmatprep.subr.bf16.mxu0 %v720
        %784 = vmatpush1.bf16.msra.mxu0 %v719
        %785 = vmatprep.subr.bf16.mxu0 %v722
        %786 = vmatpush1.bf16.msra.mxu0 %v721
        %787 = vmatprep.subr.bf16.mxu0 %v724
        %788 = vmatpush1.bf16.msra.mxu0 %v723
        %789 = vmatprep.subr.bf16.mxu0 %v726
        %790 = vmatpush1.bf16.msra.mxu0 %v725
        %791 = vmatprep.subr.bf16.mxu0 %v728
        %792 = vmatpush1.bf16.msra.mxu0 %v727
        %793 = vmatprep.subr.bf16.mxu0 %v730
        %794 = vmatpush1.bf16.msra.mxu0 %v729
        %795 = vmatprep.subr.bf16.mxu0 %v732
        %796 = vmatpush1.bf16.msra.mxu0 %v731
        %797 = vmatprep.subr.bf16.mxu0 %v734
        %798 = vmatpush1.bf16.msra.mxu0 %v733
        %799 = vmatprep.subr.bf16.mxu0 %v736
        %800 = vmatpush1.bf16.msra.mxu0 %v735
        %801 = vmatprep.subr.bf16.mxu0 %v738
        %802 = vmatpush1.bf16.msra.mxu0 %v737
        %803 = vmatprep.subr.bf16.mxu0 %v740
        %804 = vmatpush1.bf16.msra.mxu0 %v739
        %805 = vmatprep.subr.bf16.mxu0 %v742
        %806 = vmatpush1.bf16.msra.mxu0 %v741
        %807 = vmatprep.subr.bf16.mxu0 %v744
        %808 = vmatpush1.bf16.msra.mxu0 %v743
        %809 = vmatprep.mubr.bf16.mxu0 %v558
        %810 = vmatmul.mubr.bf16.gmra.mrb[0].mxu0 %v557
        %v811 = vpop.f32.mrb[0].mxu0
        %v812 = vadd.f32 %v610, %v811
        %v813 = vpop.f32.mrb[0].mxu0
        %v814 = vadd.f32 %v614, %v813
        %v815 = vpop.f32.mrb[0].mxu0
        %v816 = vadd.f32 %v610, %v815
        %v817 = vpop.f32.mrb[0].mxu0
        %v818 = vadd.f32 %v614, %v817
        %819 = vmatprep.mubr.bf16.mxu0 %v560
        %820 = vmatmul.mubr.bf16.gmra.mrb[0].mxu0 %v559
        %v821 = vpop.f32.mrb[0].mxu0
        %v822 = vadd.f32 %v610, %v821
        %v823 = vpop.f32.mrb[0].mxu0
        %v824 = vadd.f32 %v614, %v823
        %v825 = vpop.f32.mrb[0].mxu0
        %v826 = vadd.f32 %v610, %v825
        %v827 = vpop.f32.mrb[0].mxu0
        %v828 = vadd.f32 %v614, %v827
        %829 = vmatprep.mubr.bf16.mxu0 %v562
        %830 = vmatmul.mubr.bf16.gmra.mrb[0].mxu0 %v561
        %v831 = vpop.f32.mrb[0].mxu0
        %v832 = vadd.f32 %v610, %v831
        %v833 = vpop.f32.mrb[0].mxu0
        %v834 = vadd.f32 %v614, %v833
        %v835 = vpop.f32.mrb[0].mxu0
        %v836 = vadd.f32 %v610, %v835
        %v837 = vpop.f32.mrb[0].mxu0
        %v838 = vadd.f32 %v614, %v837
        %839 = vmatprep.mubr.bf16.mxu0 %v564
        %840 = vmatmul.mubr.bf16.gmra.mrb[0].mxu0 %v563
        %v841 = vpop.f32.mrb[0].mxu0
        %v842 = vadd.f32 %v610, %v841
        %v843 = vpop.f32.mrb[0].mxu0
        %v844 = vadd.f32 %v614, %v843
        %v845 = vpop.f32.mrb[0].mxu0
        %v846 = vadd.f32 %v610, %v845
        %v847 = vpop.f32.mrb[0].mxu0
        %v848 = vadd.f32 %v614, %v847
        %849 = vmatprep.mubr.bf16.mxu0 %v566
        %850 = vmatmul.mubr.bf16.gmra.mrb[0].mxu0 %v565
        %v851 = vpop.f32.mrb[0].mxu0
        %v852 = vadd.f32 %v610, %v851
        %v853 = vpop.f32.mrb[0].mxu0
        %v854 = vadd.f32 %v614, %v853
        %v855 = vpop.f32.mrb[0].mxu0
        %v856 = vadd.f32 %v610, %v855
        %v857 = vpop.f32.mrb[0].mxu0
        %v858 = vadd.f32 %v614, %v857
        %859 = vmatprep.mubr.bf16.mxu0 %v568
        %860 = vmatmul.mubr.bf16.gmra.mrb[0].mxu0 %v567
        %v861 = vpop.f32.mrb[0].mxu0
        %v862 = vadd.f32 %v610, %v861
        %v863 = vpop.f32.mrb[0].mxu0
        %v864 = vadd.f32 %v614, %v863
        %v865 = vpop.f32.mrb[0].mxu0
        %v866 = vadd.f32 %v610, %v865
        %v867 = vpop.f32.mrb[0].mxu0
        %v868 = vadd.f32 %v614, %v867
        %869 = vmatprep.mubr.bf16.mxu0 %v570
        %870 = vmatmul.mubr.bf16.gmra.mrb[0].mxu0 %v569
        %v871 = vpop.f32.mrb[0].mxu0
        %v872 = vadd.f32 %v610, %v871
        %v873 = vpop.f32.mrb[0].mxu0
        %v874 = vadd.f32 %v614, %v873
        %v875 = vpop.f32.mrb[0].mxu0
        %v876 = vadd.f32 %v610, %v875
        %v877 = vpop.f32.mrb[0].mxu0
        %v878 = vadd.f32 %v614, %v877
        %879 = vmatprep.mubr.bf16.mxu0 %v572
        %880 = vmatmul.mubr.bf16.gmra.mrb[0].mxu0 %v571
        %v881 = vpop.f32.mrb[0].mxu0
        %v882 = vadd.f32 %v610, %v881
        %v883 = vpop.f32.mrb[0].mxu0
        %v884 = vadd.f32 %v614, %v883
        %v885 = vpop.f32.mrb[0].mxu0
        %v886 = vadd.f32 %v610, %v885
        %v887 = vpop.f32.mrb[0].mxu0
        %v888 = vadd.f32 %v614, %v887
        %889 = vdwg.mxu0
        %v890 = vmax.f32 %v812, 0.0
        %v891 = vmax.f32 %v814, 0.0
        %v892 = vmax.f32 %v816, 0.0
        %v893 = vmax.f32 %v818, 0.0
        %v894 = vmax.f32 %v822, 0.0
        %v895 = vmax.f32 %v824, 0.0
        %v896 = vmax.f32 %v826, 0.0
        %v897 = vmax.f32 %v828, 0.0
        %v898 = vmax.f32 %v832, 0.0
        %v899 = vmax.f32 %v834, 0.0
        %v900 = vmax.f32 %v836, 0.0
        %v901 = vmax.f32 %v838, 0.0
        %v902 = vmax.f32 %v842, 0.0
        %v903 = vmax.f32 %v844, 0.0
        %v904 = vmax.f32 %v846, 0.0
        %v905 = vmax.f32 %v848, 0.0
        %v906 = vmax.f32 %v852, 0.0
        %v907 = vmax.f32 %v854, 0.0
        %v908 = vmax.f32 %v856, 0.0
        %v909 = vmax.f32 %v858, 0.0
        %v910 = vmax.f32 %v862, 0.0
        %v911 = vmax.f32 %v864, 0.0
        %v912 = vmax.f32 %v866, 0.0
        %v913 = vmax.f32 %v868, 0.0
        %v914 = vmax.f32 %v872, 0.0
        %v915 = vmax.f32 %v874, 0.0
        %v916 = vmax.f32 %v876, 0.0
        %v917 = vmax.f32 %v878, 0.0
        %v918 = vmax.f32 %v882, 0.0
        %v919 = vmax.f32 %v884, 0.0
        %v920 = vmax.f32 %v886, 0.0
        %v921 = vmax.f32 %v888, 0.0
        %v922 = vld [vmem:[%s5] sm:$0x3]
        %v923 = vpack.c.bf16 %v892, %v890
        %v924 = vpack.c.bf16 %v893, %v891
        %v925 = vpack.c.bf16 %v896, %v894
        %v926 = vpack.c.bf16 %v897, %v895
        %v927 = vpack.c.bf16 %v900, %v898
        %v928 = vpack.c.bf16 %v901, %v899
        %v929 = vpack.c.bf16 %v904, %v902
        %v930 = vpack.c.bf16 %v905, %v903
        %v931 = vpack.c.bf16 %v908, %v906
        %v932 = vpack.c.bf16 %v909, %v907
        %v933 = vpack.c.bf16 %v912, %v910
        %v934 = vpack.c.bf16 %v913, %v911
        %v935 = vpack.c.bf16 %v916, %v914
        %v936 = vpack.c.bf16 %v917, %v915
        %v937 = vpack.c.bf16 %v920, %v918
        %v938 = vpack.c.bf16 %v921, %v919
        %v939 = vld [vmem:[%s6] sm:$0x3]
        %941 = vset.pattern.permute.xlu0 0
        %942 = vperm.xlu0 %941, %v939
        %v943 = vpop.permute.xlu0 %942
        %v947 = vunpack.c.l.s4 1966171168
        %v948 = vunpack.c.0.s8 %v947
        %v949 = vlaneseq
        %v950 = vshrl.u32 %v949, 7
        %v951 = vsub.s32 %v948, %v950
        %v952 = vrot.slane %v922, %v951
        %v953 = vcombine.high %v952, %v952
        %v955 = vunpack.c.l.s4 1966171168
        %v956 = vunpack.c.0.s8 %v955
        %v957 = vlaneseq
        %v958 = vshrl.u32 %v957, 7
        %v959 = vsub.s32 %v956, %v958
        %v960 = vrot.slane %v952, %v959
        %v962 = vunpack.c.l.s4 1966171168
        %v963 = vunpack.c.0.s8 %v962
        %v964 = vlaneseq
        %v965 = vshrl.u32 %v964, 7
        %v966 = vsub.s32 %v963, %v965
        %v967 = vrot.slane %v953, %v966
        %970 = vmatprep.subr.bf16.mxu0 %v924
        %971 = vmatpush1.bf16.xpose.msra.mxu0 %v923
        %972 = vmatprep.subr.bf16.mxu0 %v926
        %973 = vmatpush1.bf16.xpose.msra.mxu0 %v925
        %974 = vmatprep.subr.bf16.mxu0 %v928
        %975 = vmatpush1.bf16.xpose.msra.mxu0 %v927
        %976 = vmatprep.subr.bf16.mxu0 %v930
        %977 = vmatpush1.bf16.xpose.msra.mxu0 %v929
        %978 = vmatprep.subr.bf16.mxu0 %v932
        %979 = vmatpush1.bf16.xpose.msra.mxu0 %v931
        %980 = vmatprep.subr.bf16.mxu0 %v934
        %981 = vmatpush1.bf16.xpose.msra.mxu0 %v933
        %982 = vmatprep.subr.bf16.mxu0 %v936
        %983 = vmatpush1.bf16.xpose.msra.mxu0 %v935
        %984 = vmatprep.subr.bf16.mxu0 %v938
        %985 = vmatpush1.bf16.xpose.msra.mxu0 %v937
        %986 = vmatprep.subr.bf16.mxu0 0
        %987 = vmatpush1.bf16.xpose.msra.mxu0 0
        %988 = vmatprep.subr.bf16.mxu0 0
        %989 = vmatpush1.bf16.xpose.msra.mxu0 0
        %990 = vmatprep.subr.bf16.mxu0 0
        %991 = vmatpush1.bf16.xpose.msra.mxu0 0
        %992 = vmatprep.subr.bf16.mxu0 0
        %993 = vmatpush1.bf16.xpose.msra.mxu0 0
        %994 = vmatprep.subr.bf16.mxu0 0
        %995 = vmatpush1.bf16.xpose.msra.mxu0 0
        %996 = vmatprep.subr.bf16.mxu0 0
        %997 = vmatpush1.bf16.xpose.msra.mxu0 0
        %998 = vmatprep.subr.bf16.mxu0 0
        %999 = vmatpush1.bf16.xpose.msra.mxu0 0
        %1000 = vmatprep.subr.bf16.mxu0 0
        %1001 = vmatpush1.bf16.xpose.msra.mxu0 0
        %1002 = vmatprep.mubr.bf16.mxu0 %v967
        %1003 = vmatmul.mubr.bf16.gmra.mrb[0].mxu0 %v960
        %v1004 = vpop.f32.mrb[0].mxu0
        %v1005 = vadd.f32 %v943, %v1004
        %v1006 = vpop.f32.mrb[0].mxu0
        %v1007 = vpop.f32.mrb[0].mxu0
        %v1008 = vpop.f32.mrb[0].mxu0
        %1009 = vdwg.mxu0
        %1010 = vst [vmem:[%s287] sm:$0x3] %v1005
        %s1011 = sand.u32 %s182, 1
        %s1012 = scalar_lea.sflag [#allocation4], %s1011
        %s1013 = sand.u32 %s182, 1
        %s1014 = smul.addr %s1013, 2
        %s1015 = scalar_lea.vmem [#allocation5], %s1014
        // Predicated region
        $region53: #{tpu_custom_call.1} parent=47 // pred_check
          %p1016 = pneg %p192
        $region54: #{tpu_custom_call.1} parent=47 // pred_check_branch
          %1018 = sbr.rel (%p1016) target = $region56
        $region55: #{tpu_custom_call.1} parent=47 // pred_region
          %s1020 = ssub.s32 32, 32
          %1021 = vsyncadd %s1012, %s1020
          %s1022 = smul.addr %s22, 32
          %s1023 = scalar_lea.hbm %s7, %s1022
          %s1025 = sshll.u32 %s1015, 4
          %s1026 = int_to_ptr.vmem [resolvable:$true] %s1025
          %1028 = dma.vmem_to_hbm [thread:$0]  %s1026, 32, %s1023, %s1012
        $region56: #{tpu_custom_call.1} parent=47 // pred_fallthru
          _
      $region48: #{tpu_custom_call.1} parent=5 // pred_fallthru
        _
      %p1029 = scmp.le.s32.totalorder 2, %s17
      // Predicated region
      $region57: #{tpu_custom_call.1} parent=5 // pred_check
        %p1030 = pneg %p1029
      $region58: #{tpu_custom_call.1} parent=5 // pred_check_branch
        %1032 = sbr.rel (%p1030) target = $region60
      $region59: #{tpu_custom_call.1} parent=5 // pred_region
        %s1033 = ssub.s32 %s17, 2
        // Predicated region
        $region61: #{tpu_custom_call.1} parent=59 // pred_check
          %p1034 = pneg %p198
        $region62: #{tpu_custom_call.1} parent=59 // pred_check_branch
          %1036 = sbr.rel (%p1034) target = $region64
        $region63: #{tpu_custom_call.1} parent=59 // pred_region
          %s1037 = sand.u32 %s183, 1
          %s1038 = scalar_lea.sflag [#allocation4], %s1037
          %s1039 = sand.u32 %s183, 1
          %s1040 = smul.addr %s1039, 2
          %s1041 = scalar_lea.vmem [#allocation5], %s1040
          %1042 = dma.done %s1038, 32
        $region64: #{tpu_custom_call.1} parent=59 // pred_fallthru
          _
      $region60: #{tpu_custom_call.1} parent=5 // pred_fallthru
        _
    $region6: #{tpu_custom_call.1} parent=1 // loop_footer
      %s21 = sadd.s32 1, %s17
    $region7: #{tpu_custom_call.1} parent=1 // loop_footer_branch
      %16 = sbr.rel target = $region3
    $region8: #{tpu_custom_call.1} parent=1 // loop_exit
      _
    %1043 = vsyncpa [#allocation3], 1
    %s1044 = scalar_lea.sflag [#allocation3], 1
    %1045 = vsyncpa %s1044, 1
    %1046 = vsyncpa [#allocation4], 1
    %s1047 = scalar_lea.sflag [#allocation4], 1
    %1048 = vsyncpa %s1047, 1

</llo_original>
